<compile_context>
chip_gen: v5e
topology: v5e:2x2
jax: 0.10.0
libtpu: 0.0.40
codegen_flags: <defaults>
</compile_context>

<pallas_src>
import jax
import jax.numpy as jnp
from jax.experimental import pallas as pl
from jax.experimental.pallas import tpu as pltpu


def _patch_embed_kernel(patches_ref, w_ref, pos_ref, cls_ref, out_ref):
    # patches_ref: (Bt, N, K)   bf16  flattened patches for Bt batch elements
    # w_ref:       (K, E)       bf16  conv weight, flattened & transposed
    # pos_ref:     (N, E)       f32   positions[1:] with conv bias pre-fused
    # cls_ref:     (1, E)       f32   cls_token + positions[0]
    # out_ref:     (Bt, N+1, E)       full sequence block (cls row included)
    Bt, N, K = patches_ref.shape
    E = w_ref.shape[1]
    w = w_ref[...]

    if N % 8 == 0:
        # Sublane-aligned leading-dim merge: one tall MXU matmul, M = Bt*N.
        p = patches_ref[...].reshape(Bt * N, K)
        proj = jnp.dot(p, w, preferred_element_type=jnp.float32)
        proj = proj.reshape(Bt, N, E)
    else:
        # Batched dot (lowers to per-b MXU matmuls) — no Python unroll.
        proj = jnp.einsum("bnk,ke->bne", patches_ref[...], w,
                          preferred_element_type=jnp.float32)

    # Body rows land at sequence positions 1..N; row 0 is the cls token row.
    out_ref[:, 1:, :] = (proj + pos_ref[...][None, :, :]).astype(out_ref.dtype)
    out_ref[:, 0:1, :] = jnp.broadcast_to(
        cls_ref[...], (Bt, 1, E)).astype(out_ref.dtype)


def patch_embedding_forward(x, conv_w, conv_b, cls_token, positions, patch_size,
                            batch_tile=None, out_dtype=None):
    """x: [B, C, H, W] (NCHW, float32). Returns [B, (H//ps)*(W//ps) + 1, E]."""
    B, C, H, W = x.shape
    ps = patch_size
    E = conv_w.shape[0]
    nh, nw = H // ps, W // ps
    N = nh * nw
    K = C * ps * ps
    out_dtype = x.dtype if out_dtype is None else out_dtype
    out_bytes = jnp.dtype(out_dtype).itemsize

    # ---- glue: patchify (pure layout; XLA fuses the transpose + bf16 cast) ----
    # Patch order = row-major (nh, nw); element order = (C, ph, pw) to match
    # the flattened conv weight [E, C, ps, ps].
    patches = x.reshape(B, C, nh, ps, nw, ps)
    patches = patches.transpose(0, 2, 4, 1, 3, 5).reshape(B, N, K)
    patches = patches.astype(jnp.bfloat16)

    # NOTE: bf16 MXU operands change numerics slightly vs a pure-f32 Conv2d
    # (relative error ~1e-3 at ViT-scale K); keep f32 operands if that matters.
    w_mat = conv_w.reshape(E, K).T.astype(jnp.bfloat16)                  # (K, E)
    pos_body = (positions[1:] + conv_b[None, :]).astype(jnp.float32)     # (N, E)
    cls_row = (cls_token.reshape(1, E) + positions[0:1]).astype(jnp.float32)

    # ---- batch tile: tall-M tiles within a portable VMEM budget ----
    if batch_tile is None:
        target_rows, cap_rows = 1024, 2048
        bt = max(1, min(B, max(1, target_rows // max(N, 1))))
        bt = min(bt, max(1, cap_rows // max(N, 1)))
        # 2x double-buffered streams + invariant operands must fit ~24 MiB
        # (safe under v7x's 64 MiB physical / 32 MiB scoped VMEM).
        fixed = K * E * 2 + N * E * 4 + E * 4
        per_b = N * K * 2 + (N + 1) * E * out_bytes
        budget = 24 * (2 ** 20) - 2 * fixed
        bt = max(1, min(bt, budget // (2 * per_b)))
        # >= 2 grid steps so both v7x TensorCores get a "parallel" step.
        if B >= 2:
            bt = min(bt, -(-B // 2))
    else:
        bt = int(batch_tile)
    bt = max(1, min(bt, B))
    grid = (pl.cdiv(B, bt),)   # partial last tile is masked by Pallas — no dropped rows

    flops = 2 * B * N * K * E
    bytes_accessed = (B * N * K * 2 + K * E * 2 + (N + 1) * E * 4
                      + B * (N + 1) * E * out_bytes)
    cost = pl.CostEstimate(flops=flops, transcendentals=0,
                           bytes_accessed=bytes_accessed)

    fixed = K * E * 2 + N * E * 4 + E * 4
    per_step = bt * N * K * 2 + bt * (N + 1) * E * out_bytes
    vmem_limit = int(min(112 * (2 ** 20),
                         max(32 * (2 ** 20), 2 * per_step + 2 * fixed + (4 << 20))))

    def make_call(single_buffer_invariants):
        def inv_spec(shape):
            idx_map = lambda i, _s=shape: tuple(0 for _ in _s)
            if single_buffer_invariants:
                # Grid-invariant operand: fetched once, single-buffered.
                return pl.BlockSpec(shape, idx_map, pipeline_mode=pl.Buffered(1))
            return pl.BlockSpec(shape, idx_map)

        return pl.pallas_call(
            _patch_embed_kernel,
            out_shape=jax.ShapeDtypeStruct((B, N + 1, E), out_dtype),
            grid=grid,
            in_specs=[
                pl.BlockSpec((bt, N, K), lambda i: (i, 0, 0)),
                inv_spec((K, E)),
                inv_spec((N, E)),
                inv_spec((1, E)),
            ],
            out_specs=pl.BlockSpec((bt, N + 1, E), lambda i: (i, 0, 0)),
            compiler_params=pltpu.CompilerParams(
                dimension_semantics=("parallel",),
                vmem_limit_bytes=vmem_limit),
            cost_estimate=cost,
        )

    try:
        return make_call(True)(patches, w_mat, pos_body, cls_row)
    except Exception:
        # Fallback for jax builds that reject pipeline_mode=pl.Buffered(1);
        # identical kernel, default double-buffering for the tiny operands.
        return make_call(False)(patches, w_mat, pos_body, cls_row)


if __name__ == "__main__":
    # Small shapes consistent with the module: in_channels=4, patch_size=4,
    # emb_size=32, img_size=16 -> N = (16//4)^2 = 16 patches, seq = 17.
    B, C, H, W = 2, 4, 16, 16
    ps, E = 4, 32
    N = (H // ps) * (W // ps)
    K = C * ps * ps

    key = jax.random.PRNGKey(0)
    kx, kw, kb, kc, kp = jax.random.split(key, 5)
    x = jax.random.normal(kx, (B, C, H, W), dtype=jnp.float32)
    conv_w = jax.random.normal(kw, (E, C, ps, ps), dtype=jnp.float32) * 0.02
    conv_b = jax.random.normal(kb, (E,), dtype=jnp.float32) * 0.02
    cls_token = jax.random.normal(kc, (1, 1, E), dtype=jnp.float32)
    positions = jax.random.normal(kp, (N + 1, E), dtype=jnp.float32)

    out = patch_embedding_forward(x, conv_w, conv_b, cls_token, positions, ps)
    out = jax.block_until_ready(out)

    # Reference (plain JAX) with the same bf16 input cast / f32 accumulation.
    patches_r = x.reshape(B, C, H // ps, ps, W // ps, ps)
    patches_r = patches_r.transpose(0, 2, 4, 1, 3, 5).reshape(B, N, K)
    patches_r = patches_r.astype(jnp.bfloat16)
    w_r = conv_w.reshape(E, K).T.astype(jnp.bfloat16)
    proj = jnp.einsum("bnk,ke->bne", patches_r, w_r,
                      preferred_element_type=jnp.float32) + conv_b
    ref = jnp.concatenate(
        [jnp.broadcast_to(cls_token, (B, 1, E)), proj], axis=1) + positions

    assert out.shape == (B, N + 1, E)
    assert out.dtype == x.dtype
    err = float(jnp.max(jnp.abs(out - ref)))
    assert jnp.allclose(out, ref, atol=1e-4, rtol=1e-3), f"max abs err = {err}"
    print("KERNEL_OK")
</pallas_src>

<mosaic_0001>
module attributes {stable_mosaic.version = 11 : i64} {
  func.func @_patch_embed_kernel(%arg0: i32, %arg1: memref<1x16x64xbf16, #tpu.memory_space<vmem>>, %arg2: memref<64x32xbf16, #tpu.memory_space<vmem>>, %arg3: memref<16x32xf32, #tpu.memory_space<vmem>>, %arg4: memref<1x32xf32, #tpu.memory_space<vmem>>, %arg5: memref<1x17x32xf32, #tpu.memory_space<vmem>>) attributes {dimension_semantics = [#tpu.dimension_semantics<parallel>], iteration_bounds = array<i64: 2>, scalar_prefetch = 0 : i64, scratch_operands = 0 : i64, tpu.core_type = #tpu.core_type<tc>, window_params = [{transform_indices = @transform_0, window_bounds = array<i64: 1, 16, 64>}, {pipeline_mode = #tpu.pipeline_mode<synchronous>, transform_indices = @transform_1, window_bounds = array<i64: 64, 32>}, {pipeline_mode = #tpu.pipeline_mode<synchronous>, transform_indices = @transform_2, window_bounds = array<i64: 16, 32>}, {pipeline_mode = #tpu.pipeline_mode<synchronous>, transform_indices = @transform_3, window_bounds = array<i64: 1, 32>}, {transform_indices = @transform_4, window_bounds = array<i64: 1, 17, 32>}]} {
    %c0 = arith.constant 0 : index
    %c0_0 = arith.constant 0 : index
    %0 = vector.load %arg2[%c0, %c0_0] : memref<64x32xbf16, #tpu.memory_space<vmem>>, vector<64x32xbf16>
    %c0_1 = arith.constant 0 : index
    %c0_2 = arith.constant 0 : index
    %c0_3 = arith.constant 0 : index
    %1 = vector.load %arg1[%c0_1, %c0_2, %c0_3] : memref<1x16x64xbf16, #tpu.memory_space<vmem>>, vector<1x16x64xbf16>
    %2 = vector.shape_cast %1 : vector<1x16x64xbf16> to vector<16x64xbf16>
    %cst = arith.constant dense<0.000000e+00> : vector<16x32xf32>
    %3 = tpu.matmul %2, %0, %cst {dimension_numbers = #tpu.dot_dimension_numbers<[1], [0], [0], [1], [0, 0, 1, 1], [], []>} : vector<16x64xbf16>, vector<64x32xbf16>, vector<16x32xf32> -> vector<16x32xf32>
    %4 = vector.shape_cast %3 : vector<16x32xf32> to vector<1x16x32xf32>
    %c0_4 = arith.constant 0 : index
    %c0_5 = arith.constant 0 : index
    %5 = vector.load %arg3[%c0_4, %c0_5] : memref<16x32xf32, #tpu.memory_space<vmem>>, vector<16x32xf32>
    %6 = vector.shape_cast %5 : vector<16x32xf32> to vector<1x16x32xf32>
    %7 = arith.addf %4, %6 : vector<1x16x32xf32>
    %c0_6 = arith.constant 0 : index
    %c1 = arith.constant 1 : index
    %c0_7 = arith.constant 0 : index
    %8 = vector.load %arg5[%c0_6, %c1, %c0_7] : memref<1x17x32xf32, #tpu.memory_space<vmem>>, vector<1x16x32xf32>
    tpu.vector_store %arg5[%c0_6, %c1, %c0_7], %7 {strides = array<i32>} : memref<1x17x32xf32, #tpu.memory_space<vmem>>, vector<1x16x32xf32>,
    %c0_8 = arith.constant 0 : index
    %c0_9 = arith.constant 0 : index
    %9 = vector.load %arg4[%c0_8, %c0_9] : memref<1x32xf32, #tpu.memory_space<vmem>>, vector<1x32xf32>
    %10 = vector.shape_cast %9 : vector<1x32xf32> to vector<1x1x32xf32>
    %c0_10 = arith.constant 0 : index
    %c0_11 = arith.constant 0 : index
    %c0_12 = arith.constant 0 : index
    %11 = vector.load %arg5[%c0_10, %c0_11, %c0_12] : memref<1x17x32xf32, #tpu.memory_space<vmem>>, vector<1x1x32xf32>
    tpu.vector_store %arg5[%c0_10, %c0_11, %c0_12], %10 {strides = array<i32>} : memref<1x17x32xf32, #tpu.memory_space<vmem>>, vector<1x1x32xf32>,
    return
  }
  func.func @transform_0(%arg0: i32) -> (i32, i32, i32) {
    %c0_i32 = arith.constant 0 : i32
    %c0_i32_0 = arith.constant 0 : i32
    %c0_i32_1 = arith.constant 0 : i32
    return %arg0, %c0_i32, %c0_i32_0 : i32, i32, i32
  }
  func.func @transform_1(%arg0: i32) -> (i32, i32) {
    %c0_i32 = arith.constant 0 : i32
    %c0_i32_0 = arith.constant 0 : i32
    %c0_i32_1 = arith.constant 0 : i32
    return %c0_i32, %c0_i32_0 : i32, i32
  }
  func.func @transform_2(%arg0: i32) -> (i32, i32) {
    %c0_i32 = arith.constant 0 : i32
    %c0_i32_0 = arith.constant 0 : i32
    %c0_i32_1 = arith.constant 0 : i32
    return %c0_i32, %c0_i32_0 : i32, i32
  }
  func.func @transform_3(%arg0: i32) -> (i32, i32) {
    %c0_i32 = arith.constant 0 : i32
    %c0_i32_0 = arith.constant 0 : i32
    %c0_i32_1 = arith.constant 0 : i32
    return %c0_i32, %c0_i32_0 : i32, i32
  }
  func.func @transform_4(%arg0: i32) -> (i32, i32, i32) {
    %c0_i32 = arith.constant 0 : i32
    %c0_i32_0 = arith.constant 0 : i32
    %c0_i32_1 = arith.constant 0 : i32
    return %arg0, %c0_i32, %c0_i32_0 : i32, i32, i32
  }
}

module attributes {stable_mosaic.version = 11 : i64} {
  func.func @_patch_embed_kernel(%arg0: i32, %arg1: memref<1x16x64xbf16, #tpu.memory_space<vmem>>, %arg2: memref<64x32xbf16, #tpu.memory_space<vmem>>, %arg3: memref<16x32xf32, #tpu.memory_space<vmem>>, %arg4: memref<1x32xf32, #tpu.memory_space<vmem>>, %arg5: memref<1x17x32xf32, #tpu.memory_space<vmem>>) attributes {dimension_semantics = [#tpu.dimension_semantics<parallel>], iteration_bounds = array<i64: 2>, scalar_prefetch = 0 : i64, scratch_operands = 0 : i64, tpu.core_type = #tpu.core_type<tc>, window_params = [{transform_indices = @transform_0, window_bounds = array<i64: 1, 16, 64>}, {pipeline_mode = #tpu.pipeline_mode<synchronous>, transform_indices = @transform_1, window_bounds = array<i64: 64, 32>}, {pipeline_mode = #tpu.pipeline_mode<synchronous>, transform_indices = @transform_2, window_bounds = array<i64: 16, 32>}, {pipeline_mode = #tpu.pipeline_mode<synchronous>, transform_indices = @transform_3, window_bounds = array<i64: 1, 32>}, {transform_indices = @transform_4, window_bounds = array<i64: 1, 17, 32>}]} {
    %c0 = arith.constant 0 : index
    %c0_0 = arith.constant 0 : index
    %0 = vector.load %arg2[%c0, %c0_0] : memref<64x32xbf16, #tpu.memory_space<vmem>>, vector<64x32xbf16>
    %c0_1 = arith.constant 0 : index
    %c0_2 = arith.constant 0 : index
    %c0_3 = arith.constant 0 : index
    %1 = vector.load %arg1[%c0_1, %c0_2, %c0_3] : memref<1x16x64xbf16, #tpu.memory_space<vmem>>, vector<1x16x64xbf16>
    %2 = vector.shape_cast %1 : vector<1x16x64xbf16> to vector<16x64xbf16>
    %cst = arith.constant dense<0.000000e+00> : vector<16x32xf32>
    %3 = tpu.matmul %2, %0, %cst {dimension_numbers = #tpu.dot_dimension_numbers<[1], [0], [0], [1], [0, 0, 1, 1], [], []>} : vector<16x64xbf16>, vector<64x32xbf16>, vector<16x32xf32> -> vector<16x32xf32>
    %4 = vector.shape_cast %3 : vector<16x32xf32> to vector<1x16x32xf32>
    %c0_4 = arith.constant 0 : index
    %c0_5 = arith.constant 0 : index
    %5 = vector.load %arg3[%c0_4, %c0_5] : memref<16x32xf32, #tpu.memory_space<vmem>>, vector<16x32xf32>
    %6 = vector.shape_cast %5 : vector<16x32xf32> to vector<1x16x32xf32>
    %7 = arith.addf %4, %6 : vector<1x16x32xf32>
    %c0_6 = arith.constant 0 : index
    %c1 = arith.constant 1 : index
    %c0_7 = arith.constant 0 : index
    %8 = vector.load %arg5[%c0_6, %c1, %c0_7] : memref<1x17x32xf32, #tpu.memory_space<vmem>>, vector<1x16x32xf32>
    tpu.vector_store %arg5[%c0_6, %c1, %c0_7], %7 {strides = array<i32>} : memref<1x17x32xf32, #tpu.memory_space<vmem>>, vector<1x16x32xf32>,
    %c0_8 = arith.constant 0 : index
    %c0_9 = arith.constant 0 : index
    %9 = vector.load %arg4[%c0_8, %c0_9] : memref<1x32xf32, #tpu.memory_space<vmem>>, vector<1x32xf32>
    %10 = vector.shape_cast %9 : vector<1x32xf32> to vector<1x1x32xf32>
    %c0_10 = arith.constant 0 : index
    %c0_11 = arith.constant 0 : index
    %c0_12 = arith.constant 0 : index
    %11 = vector.load %arg5[%c0_10, %c0_11, %c0_12] : memref<1x17x32xf32, #tpu.memory_space<vmem>>, vector<1x1x32xf32>
    tpu.vector_store %arg5[%c0_10, %c0_11, %c0_12], %10 {strides = array<i32>} : memref<1x17x32xf32, #tpu.memory_space<vmem>>, vector<1x1x32xf32>,
    return
  }
  func.func @transform_0(%arg0: i32) -> (i32, i32, i32) {
    %c0_i32 = arith.constant 0 : i32
    %c0_i32_0 = arith.constant 0 : i32
    %c0_i32_1 = arith.constant 0 : i32
    return %arg0, %c0_i32, %c0_i32_0 : i32, i32, i32
  }
  func.func @transform_1(%arg0: i32) -> (i32, i32) {
    %c0_i32 = arith.constant 0 : i32
    %c0_i32_0 = arith.constant 0 : i32
    %c0_i32_1 = arith.constant 0 : i32
    return %c0_i32, %c0_i32_0 : i32, i32
  }
  func.func @transform_2(%arg0: i32) -> (i32, i32) {
    %c0_i32 = arith.constant 0 : i32
    %c0_i32_0 = arith.constant 0 : i32
    %c0_i32_1 = arith.constant 0 : i32
    return %c0_i32, %c0_i32_0 : i32, i32
  }
  func.func @transform_3(%arg0: i32) -> (i32, i32) {
    %c0_i32 = arith.constant 0 : i32
    %c0_i32_0 = arith.constant 0 : i32
    %c0_i32_1 = arith.constant 0 : i32
    return %c0_i32, %c0_i32_0 : i32, i32
  }
  func.func @transform_4(%arg0: i32) -> (i32, i32, i32) {
    %c0_i32 = arith.constant 0 : i32
    %c0_i32_0 = arith.constant 0 : i32
    %c0_i32_1 = arith.constant 0 : i32
    return %arg0, %c0_i32, %c0_i32_0 : i32, i32, i32
  }
}

</mosaic_0001>

<llo_original>
// kernel: tpu_custom_call.1
$region0: #{tpu_custom_call.1}
  #allocation0 [shape = 'u32[]', space=smem, size = 0x4, offset = 0x4, fixed_abs, tag = 'smem constant byte address 0x4 - core index']
  #allocation1 [shape = 'u32[72,128]{1,0:T(1,128)}', space=vmem, size = 0x9000, scoped, tag = 'internal scratch']
  %s0 = inlined_call_operand.vmem [shape: bf16[2,16,64], index: 0, kind: input, shape index: {}]
  %s1 = inlined_call_operand.vmem [shape: bf16[64,32], index: 1, kind: input, shape index: {}]
  %s2 = inlined_call_operand.vmem [shape: f32[16,32], index: 2, kind: input, shape index: {}]
  %s3 = inlined_call_operand.vmem [shape: f32[1,32], index: 3, kind: input, shape index: {}]
  %s4 = inlined_call_operand.vmem [shape: f32[2,17,32], index: 4, kind: output, shape index: {}]
  %s5 = sld [smem:[#allocation0]]
  $region49: #{tpu_custom_call.1} parent=0
    _
  %s7 = ssub.s32 1, %s5
  %s8 = scalar_select 0, %s7, %s5
  loop: start=0, step=1, limit=4
  $region2: #{tpu_custom_call.1} parent=0 // loop_pre_header
    _
  $region3: #{tpu_custom_call.1} parent=0 // loop_header
    %s10 = sphi 0, %s14
    %p11 = scmp.ge.s32.totalorder %s10, 4
    %s20 = sphi 0, %s22
    %s23 = sphi 0, %s20
    %s24 = sphi 0, %s23
    %s40 = sphi 0, %s24
    %s44 = sphi 0, %s44
    %s46 = sphi 0, %s44
    %s47 = sphi 0, %s46
    %s61 = sphi 0, %s47
    %s65 = sphi 0, %s65
    %s67 = sphi 0, %s65
    %s68 = sphi 0, %s67
    %s82 = sphi 0, %s68
    %s86 = sphi 0, %s86
    %s88 = sphi 0, %s86
    %s89 = sphi 0, %s88
    %s103 = sphi 0, %s89
    %s109 = sphi 0, %s111
    %s112 = sphi 0, %s109
    %s113 = sphi 0, %s112
    %s129 = sphi 0, %s113
  $region4: #{tpu_custom_call.1} parent=0 // loop_header_branch
    %13 = sbr.rel (%p11) target = $region8
  $region5: #{tpu_custom_call.1} parent=0 // loop_body
    %s15 = ssub.s32 %s10, 1
    %s16 = ssub.s32 %s10, 2
    %s17 = sadd.s32 %s10, 1
    %s18 = ssub.s32 %s10, %s17
    %p19 = scmp.eq.s32.totalorder %s18, 0
    %s21 = sadd.s32 %s20, 1
    %s22 = scalar_select %p19, %s20, %s21
    %p25 = pneg %p19
    %p26 = scmp.eq.s32.totalorder %s10, 1
    %p27 = por %p25, %p26
    %p28 = scmp.ne.s32.totalorder %s20, %s23
    %p29 = scmp.eq.s32.totalorder %s10, 0
    %p30 = por %p28, %p29
    %p31 = scmp.ne.s32.totalorder %s20, %s23
    %p32 = scmp.eq.s32.totalorder %s15, 1
    %p33 = por %p31, %p32
    %p34 = scmp.ne.s32.totalorder %s23, %s24
    %p35 = scmp.eq.s32.totalorder %s15, 0
    %p36 = por %p34, %p35
    %p37 = scmp.ne.s32.totalorder %s23, %s24
    %p38 = scmp.eq.s32.totalorder %s16, 1
    %p39 = por %p37, %p38
    %p41 = scmp.ne.s32.totalorder %s24, %s40
    %p42 = scmp.eq.s32.totalorder %s16, 0
    %p43 = por %p41, %p42
    %s45 = sadd.s32 %s44, 1
    %p48 = scmp.eq.s32.totalorder %s10, 1
    %p49 = scmp.ne.s32.totalorder %s44, %s46
    %p50 = scmp.eq.s32.totalorder %s10, 0
    %p51 = por %p49, %p50
    %p52 = scmp.ne.s32.totalorder %s44, %s46
    %p53 = scmp.eq.s32.totalorder %s15, 1
    %p54 = por %p52, %p53
    %p55 = scmp.ne.s32.totalorder %s46, %s47
    %p56 = scmp.eq.s32.totalorder %s15, 0
    %p57 = por %p55, %p56
    %p58 = scmp.ne.s32.totalorder %s46, %s47
    %p59 = scmp.eq.s32.totalorder %s16, 1
    %p60 = por %p58, %p59
    %p62 = scmp.ne.s32.totalorder %s47, %s61
    %p63 = scmp.eq.s32.totalorder %s16, 0
    %p64 = por %p62, %p63
    %s66 = sadd.s32 %s65, 1
    %p69 = scmp.eq.s32.totalorder %s10, 1
    %p70 = scmp.ne.s32.totalorder %s65, %s67
    %p71 = scmp.eq.s32.totalorder %s10, 0
    %p72 = por %p70, %p71
    %p73 = scmp.ne.s32.totalorder %s65, %s67
    %p74 = scmp.eq.s32.totalorder %s15, 1
    %p75 = por %p73, %p74
    %p76 = scmp.ne.s32.totalorder %s67, %s68
    %p77 = scmp.eq.s32.totalorder %s15, 0
    %p78 = por %p76, %p77
    %p79 = scmp.ne.s32.totalorder %s67, %s68
    %p80 = scmp.eq.s32.totalorder %s16, 1
    %p81 = por %p79, %p80
    %p83 = scmp.ne.s32.totalorder %s68, %s82
    %p84 = scmp.eq.s32.totalorder %s16, 0
    %p85 = por %p83, %p84
    %s87 = sadd.s32 %s86, 1
    %p90 = scmp.eq.s32.totalorder %s10, 1
    %p91 = scmp.ne.s32.totalorder %s86, %s88
    %p92 = scmp.eq.s32.totalorder %s10, 0
    %p93 = por %p91, %p92
    %p94 = scmp.ne.s32.totalorder %s86, %s88
    %p95 = scmp.eq.s32.totalorder %s15, 1
    %p96 = por %p94, %p95
    %p97 = scmp.ne.s32.totalorder %s88, %s89
    %p98 = scmp.eq.s32.totalorder %s15, 0
    %p99 = por %p97, %p98
    %p100 = scmp.ne.s32.totalorder %s88, %s89
    %p101 = scmp.eq.s32.totalorder %s16, 1
    %p102 = por %p100, %p101
    %p104 = scmp.ne.s32.totalorder %s89, %s103
    %p105 = scmp.eq.s32.totalorder %s16, 0
    %p106 = por %p104, %p105
    %s107 = ssub.s32 %s10, %s17
    %p108 = scmp.eq.s32.totalorder %s107, 0
    %s110 = sadd.s32 %s109, 1
    %s111 = scalar_select %p108, %s109, %s110
    %p114 = pneg %p108
    %p115 = scmp.eq.s32.totalorder %s10, 1
    %p116 = por %p114, %p115
    %p117 = scmp.ne.s32.totalorder %s109, %s112
    %p118 = scmp.eq.s32.totalorder %s10, 0
    %p119 = por %p117, %p118
    %p120 = scmp.ne.s32.totalorder %s109, %s112
    %p121 = scmp.eq.s32.totalorder %s15, 1
    %p122 = por %p120, %p121
    %p123 = scmp.ne.s32.totalorder %s112, %s113
    %p124 = scmp.eq.s32.totalorder %s15, 0
    %p125 = por %p123, %p124
    %p126 = scmp.ne.s32.totalorder %s112, %s113
    %p127 = scmp.eq.s32.totalorder %s16, 1
    %p128 = por %p126, %p127
    %p130 = scmp.ne.s32.totalorder %s113, %s129
    %p131 = scmp.eq.s32.totalorder %s16, 0
    %p132 = por %p130, %p131
    %p133 = scmp.le.s32.totalorder 1, %s10
    %p134 = scmp.lt.s32.totalorder %s10, 3
    %p135 = pnand %p133, %p134
    %p136 = pneg %p135
    // Predicated region
    $region9: #{tpu_custom_call.1} parent=5 // pred_check
      _
    $region10: #{tpu_custom_call.1} parent=5 // pred_check_branch
      %138 = sbr.rel (%p135) target = $region12
    $region11: #{tpu_custom_call.1} parent=5 // pred_region
      %s139 = ssub.s32 %s10, 1
      // Predicated region
      $region13: #{tpu_custom_call.1} parent=11 // pred_check
        %p140 = pneg %p57
      $region14: #{tpu_custom_call.1} parent=11 // pred_check_branch
        %142 = sbr.rel (%p140) target = $region16
      $region15: #{tpu_custom_call.1} parent=11 // pred_region
        _
      $region16: #{tpu_custom_call.1} parent=11 // pred_fallthru
        _
      // Predicated region
      $region17: #{tpu_custom_call.1} parent=11 // pred_check
        %p143 = pneg %p78
      $region18: #{tpu_custom_call.1} parent=11 // pred_check_branch
        %145 = sbr.rel (%p143) target = $region20
      $region19: #{tpu_custom_call.1} parent=11 // pred_region
        _
      $region20: #{tpu_custom_call.1} parent=11 // pred_fallthru
        _
      // Predicated region
      $region21: #{tpu_custom_call.1} parent=11 // pred_check
        %p146 = pneg %p99
      $region22: #{tpu_custom_call.1} parent=11 // pred_check_branch
        %148 = sbr.rel (%p146) target = $region24
      $region23: #{tpu_custom_call.1} parent=11 // pred_region
        _
      $region24: #{tpu_custom_call.1} parent=11 // pred_fallthru
        _
    $region12: #{tpu_custom_call.1} parent=5 // pred_fallthru
      _
    %p149 = scmp.lt.s32.totalorder %s10, 2
    // Predicated region
    $region25: #{tpu_custom_call.1} parent=5 // pred_check
      %p150 = pneg %p149
    $region26: #{tpu_custom_call.1} parent=5 // pred_check_branch
      %152 = sbr.rel (%p150) target = $region28
    $region27: #{tpu_custom_call.1} parent=5 // pred_region
      // Predicated region
      $region29: #{tpu_custom_call.1} parent=27 // pred_check
        %p153 = pneg %p30
      $region30: #{tpu_custom_call.1} parent=27 // pred_check_branch
        %155 = sbr.rel (%p153) target = $region32
      $region31: #{tpu_custom_call.1} parent=27 // pred_region
        %p156 = scmp.lt.s32.totalorder %s10, 1
        %s157 = scalar_select %p156, %s10, 1
        %s158 = smul.addr %s157, 2
        %s159 = smul.addr %s158, 4
        %s160 = scalar_lea.vmem %s0, %s159
      $region32: #{tpu_custom_call.1} parent=27 // pred_fallthru
        _
    $region28: #{tpu_custom_call.1} parent=5 // pred_fallthru
      _
    %p161 = scmp.le.s32.totalorder 1, %s10
    %p162 = scmp.lt.s32.totalorder %s10, 3
    %p163 = pnand %p161, %p162
    %p164 = pneg %p163
    // Predicated region
    $region33: #{tpu_custom_call.1} parent=5 // pred_check
      _
    $region34: #{tpu_custom_call.1} parent=5 // pred_check_branch
      %166 = sbr.rel (%p163) target = $region36
    $region35: #{tpu_custom_call.1} parent=5 // pred_region
      %s167 = ssub.s32 %s10, 1
      %p168 = scmp.lt.s32.totalorder %s15, 1
      %s169 = scalar_select %p168, %s15, 1
      %s170 = smul.addr %s169, 2
      %s171 = smul.addr %s170, 4
      %s172 = scalar_lea.vmem %s0, %s171
      %p173 = pneg %p36
      %p174 = pneg %p33
      %p175 = pneg %p57
      %p176 = pneg %p54
      %p177 = pneg %p78
      %p178 = pneg %p75
      %p179 = pneg %p99
      %p180 = pneg %p96
      %p181 = pneg %p125
      %p182 = pneg %p122
      %p183 = scmp.lt.s32.totalorder %s15, 1
      %s184 = scalar_select %p183, %s15, 1
      %s185 = smul.addr %s184, 3
      %s186 = smul.addr %s185, 8
      %s187 = scalar_lea.vmem %s4, %s186
      %p188 = scmp.lt.s32.totalorder %s15, 1
      %s189 = scalar_select %p188, %s15, 1
      %s190 = smul.addr %s189, 2
      %s191 = smul.addr %s190, 4
      %s192 = scalar_lea.vmem %s0, %s191
      %p193 = scmp.lt.s32.totalorder %s15, 1
      %s194 = scalar_select %p193, %s15, 1
      %s195 = smul.addr %s194, 3
      %s196 = smul.addr %s195, 8
      %s197 = scalar_lea.vmem %s4, %s196
      %v199 = vld [vmem:[%s1] sm:$0xf]
      %v200 = vld [vmem:[%s1 + $0x4] sm:$0xf]
      %v201 = vld [vmem:[%s1 + $0x8] sm:$0xf]
      %v202 = vld [vmem:[%s1 + $0xc] sm:$0xf]
      %v203 = vld [vmem:[%s1 + $0x10] sm:$0xf]
      %v204 = vld [vmem:[%s1 + $0x14] sm:$0xf]
      %v205 = vld [vmem:[%s1 + $0x18] sm:$0xf]
      %v206 = vld [vmem:[%s1 + $0x1c] sm:$0xf]
      %v207 = vld [vmem:[%s192] sm:$0xf]
      %v208 = vld [vmem:[%s192 + $0x4] sm:$0xf]
      %v211 = vunpack.c.l.b16 %v207
      %v212 = vunpack.c.l.b16 %v208
      %v213 = vpack.c.b16 %v212, %v211
      %v222 = vunpack.c.l.b16 %v199
      %v223 = vunpack.c.l.b16 %v200
      %v224 = vunpack.c.l.b16 %v201
      %v225 = vunpack.c.l.b16 %v202
      %v226 = vunpack.c.l.b16 %v203
      %v227 = vunpack.c.l.b16 %v204
      %v228 = vunpack.c.l.b16 %v205
      %v229 = vunpack.c.l.b16 %v206
      %v230 = vpack.c.b16 %v223, %v222
      %v231 = vpack.c.b16 %v225, %v224
      %v232 = vpack.c.b16 %v227, %v226
      %v233 = vpack.c.b16 %v229, %v228
      %vm238 = vcmask 523264
      %v240 = vsel %vm238, %v213, 0
      %242 = vmatpush.bf16.msra.mxu0 0
      %243 = vmatpush.bf16.msra.mxu0 0
      %244 = vmatpush.bf16.msra.mxu0 0
      %245 = vmatpush.bf16.msra.mxu0 0
      %246 = vmatpush.bf16.msra.mxu0 %v233
      %247 = vmatpush.bf16.msra.mxu0 %v232
      %248 = vmatpush.bf16.msra.mxu0 %v231
      %249 = vmatpush.bf16.msra.mxu0 %v230
      %250 = vmatmul.bf16.gmra.mxu0 %v240
      %v251 = vpop.f32.mrf.mxu0
      %v252 = vadd.f32 0.0, %v251
      %v253 = vpop.f32.mrf.mxu0
      %v254 = vadd.f32 0.0, %v253
      %255 = vdwg.mxu0
      %v256 = vld [vmem:[%s2] sm:$0xff]
      %v257 = vld [vmem:[%s2 + $0x8] sm:$0xff]
      %v258 = vadd.f32 %v252, %v256
      %v259 = vadd.f32 %v254, %v257
      %vm260 = vcmask 261120
      %261 = vst.msk [vmem:[%s197 + $0x1] sm:$0xff] %vm260, %v258
      %262 = vst.msk [vmem:[%s197 + $0x9] sm:$0xff] %vm260, %v259
      %v263 = vld [vmem:[%s3] sm:$0x1]
      %vm264 = vcmask 253952
      %265 = vst.msk [vmem:[%s197] sm:$0x1] %vm264, %v263
      %p266 = scmp.lt.s32.totalorder %s15, 1
      %s267 = scalar_select %p266, %s15, 1
      %s268 = smul.addr %s267, 3
      %s269 = smul.addr %s268, 8
      %s270 = scalar_lea.vmem %s4, %s269
      // Predicated region
      $region37: #{tpu_custom_call.1} parent=35 // pred_check
        %p271 = pneg %p122
      $region38: #{tpu_custom_call.1} parent=35 // pred_check_branch
        %273 = sbr.rel (%p271) target = $region40
      $region39: #{tpu_custom_call.1} parent=35 // pred_region
        _
      $region40: #{tpu_custom_call.1} parent=35 // pred_fallthru
        _
    $region36: #{tpu_custom_call.1} parent=5 // pred_fallthru
      _
    %p274 = scmp.le.s32.totalorder 2, %s10
    // Predicated region
    $region41: #{tpu_custom_call.1} parent=5 // pred_check
      %p275 = pneg %p274
    $region42: #{tpu_custom_call.1} parent=5 // pred_check_branch
      %277 = sbr.rel (%p275) target = $region44
    $region43: #{tpu_custom_call.1} parent=5 // pred_region
      %s278 = ssub.s32 %s10, 2
      // Predicated region
      $region45: #{tpu_custom_call.1} parent=43 // pred_check
        %p279 = pneg %p128
      $region46: #{tpu_custom_call.1} parent=43 // pred_check_branch
        %281 = sbr.rel (%p279) target = $region48
      $region47: #{tpu_custom_call.1} parent=43 // pred_region
        %p282 = scmp.lt.s32.totalorder %s16, 1
        %s283 = scalar_select %p282, %s16, 1
        %s284 = smul.addr %s283, 3
        %s285 = smul.addr %s284, 8
        %s286 = scalar_lea.vmem %s4, %s285
      $region48: #{tpu_custom_call.1} parent=43 // pred_fallthru
        _
    $region44: #{tpu_custom_call.1} parent=5 // pred_fallthru
      _
  $region6: #{tpu_custom_call.1} parent=0 // loop_footer
    %s14 = sadd.s32 1, %s10
  $region7: #{tpu_custom_call.1} parent=0 // loop_footer_branch
    %9 = sbr.rel target = $region3
  $region8: #{tpu_custom_call.1} parent=0 // loop_exit
    _

// kernel: tpu_custom_call.1
$region0: #{tpu_custom_call.1}
  #allocation0 [shape = 'u32[]', space=smem, size = 0x4, offset = 0x4, fixed_abs, tag = 'smem constant byte address 0x4 - core index']
  #allocation1 [shape = 'u32[72,128]{1,0:T(1,128)}', space=vmem, size = 0x9000, scoped, tag = 'internal scratch']
  %s0 = inlined_call_operand.vmem [shape: bf16[2,16,64], index: 0, kind: input, shape index: {}]
  %s1 = inlined_call_operand.vmem [shape: bf16[64,32], index: 1, kind: input, shape index: {}]
  %s2 = inlined_call_operand.vmem [shape: f32[16,32], index: 2, kind: input, shape index: {}]
  %s3 = inlined_call_operand.vmem [shape: f32[1,32], index: 3, kind: input, shape index: {}]
  %s4 = inlined_call_operand.vmem [shape: f32[2,17,32], index: 4, kind: output, shape index: {}]
  %s5 = sld [smem:[#allocation0]]
  $region49: #{tpu_custom_call.1} parent=0
    _
  %s7 = ssub.s32 1, %s5
  %s8 = scalar_select 0, %s7, %s5
  loop: start=0, step=1, limit=4
  $region2: #{tpu_custom_call.1} parent=0 // loop_pre_header
    _
  $region3: #{tpu_custom_call.1} parent=0 // loop_header
    %s10 = sphi 0, %s14
    %p11 = scmp.ge.s32.totalorder %s10, 4
    %s20 = sphi 0, %s22
    %s23 = sphi 0, %s20
    %s24 = sphi 0, %s23
    %s40 = sphi 0, %s24
    %s44 = sphi 0, %s44
    %s46 = sphi 0, %s44
    %s47 = sphi 0, %s46
    %s61 = sphi 0, %s47
    %s65 = sphi 0, %s65
    %s67 = sphi 0, %s65
    %s68 = sphi 0, %s67
    %s82 = sphi 0, %s68
    %s86 = sphi 0, %s86
    %s88 = sphi 0, %s86
    %s89 = sphi 0, %s88
    %s103 = sphi 0, %s89
    %s109 = sphi 0, %s111
    %s112 = sphi 0, %s109
    %s113 = sphi 0, %s112
    %s129 = sphi 0, %s113
  $region4: #{tpu_custom_call.1} parent=0 // loop_header_branch
    %13 = sbr.rel (%p11) target = $region8
  $region5: #{tpu_custom_call.1} parent=0 // loop_body
    %s15 = ssub.s32 %s10, 1
    %s16 = ssub.s32 %s10, 2
    %s17 = sadd.s32 %s10, 1
    %s18 = ssub.s32 %s10, %s17
    %p19 = scmp.eq.s32.totalorder %s18, 0
    %s21 = sadd.s32 %s20, 1
    %s22 = scalar_select %p19, %s20, %s21
    %p25 = pneg %p19
    %p26 = scmp.eq.s32.totalorder %s10, 1
    %p27 = por %p25, %p26
    %p28 = scmp.ne.s32.totalorder %s20, %s23
    %p29 = scmp.eq.s32.totalorder %s10, 0
    %p30 = por %p28, %p29
    %p31 = scmp.ne.s32.totalorder %s20, %s23
    %p32 = scmp.eq.s32.totalorder %s15, 1
    %p33 = por %p31, %p32
    %p34 = scmp.ne.s32.totalorder %s23, %s24
    %p35 = scmp.eq.s32.totalorder %s15, 0
    %p36 = por %p34, %p35
    %p37 = scmp.ne.s32.totalorder %s23, %s24
    %p38 = scmp.eq.s32.totalorder %s16, 1
    %p39 = por %p37, %p38
    %p41 = scmp.ne.s32.totalorder %s24, %s40
    %p42 = scmp.eq.s32.totalorder %s16, 0
    %p43 = por %p41, %p42
    %s45 = sadd.s32 %s44, 1
    %p48 = scmp.eq.s32.totalorder %s10, 1
    %p49 = scmp.ne.s32.totalorder %s44, %s46
    %p50 = scmp.eq.s32.totalorder %s10, 0
    %p51 = por %p49, %p50
    %p52 = scmp.ne.s32.totalorder %s44, %s46
    %p53 = scmp.eq.s32.totalorder %s15, 1
    %p54 = por %p52, %p53
    %p55 = scmp.ne.s32.totalorder %s46, %s47
    %p56 = scmp.eq.s32.totalorder %s15, 0
    %p57 = por %p55, %p56
    %p58 = scmp.ne.s32.totalorder %s46, %s47
    %p59 = scmp.eq.s32.totalorder %s16, 1
    %p60 = por %p58, %p59
    %p62 = scmp.ne.s32.totalorder %s47, %s61
    %p63 = scmp.eq.s32.totalorder %s16, 0
    %p64 = por %p62, %p63
    %s66 = sadd.s32 %s65, 1
    %p69 = scmp.eq.s32.totalorder %s10, 1
    %p70 = scmp.ne.s32.totalorder %s65, %s67
    %p71 = scmp.eq.s32.totalorder %s10, 0
    %p72 = por %p70, %p71
    %p73 = scmp.ne.s32.totalorder %s65, %s67
    %p74 = scmp.eq.s32.totalorder %s15, 1
    %p75 = por %p73, %p74
    %p76 = scmp.ne.s32.totalorder %s67, %s68
    %p77 = scmp.eq.s32.totalorder %s15, 0
    %p78 = por %p76, %p77
    %p79 = scmp.ne.s32.totalorder %s67, %s68
    %p80 = scmp.eq.s32.totalorder %s16, 1
    %p81 = por %p79, %p80
    %p83 = scmp.ne.s32.totalorder %s68, %s82
    %p84 = scmp.eq.s32.totalorder %s16, 0
    %p85 = por %p83, %p84
    %s87 = sadd.s32 %s86, 1
    %p90 = scmp.eq.s32.totalorder %s10, 1
    %p91 = scmp.ne.s32.totalorder %s86, %s88
    %p92 = scmp.eq.s32.totalorder %s10, 0
    %p93 = por %p91, %p92
    %p94 = scmp.ne.s32.totalorder %s86, %s88
    %p95 = scmp.eq.s32.totalorder %s15, 1
    %p96 = por %p94, %p95
    %p97 = scmp.ne.s32.totalorder %s88, %s89
    %p98 = scmp.eq.s32.totalorder %s15, 0
    %p99 = por %p97, %p98
    %p100 = scmp.ne.s32.totalorder %s88, %s89
    %p101 = scmp.eq.s32.totalorder %s16, 1
    %p102 = por %p100, %p101
    %p104 = scmp.ne.s32.totalorder %s89, %s103
    %p105 = scmp.eq.s32.totalorder %s16, 0
    %p106 = por %p104, %p105
    %s107 = ssub.s32 %s10, %s17
    %p108 = scmp.eq.s32.totalorder %s107, 0
    %s110 = sadd.s32 %s109, 1
    %s111 = scalar_select %p108, %s109, %s110
    %p114 = pneg %p108
    %p115 = scmp.eq.s32.totalorder %s10, 1
    %p116 = por %p114, %p115
    %p117 = scmp.ne.s32.totalorder %s109, %s112
    %p118 = scmp.eq.s32.totalorder %s10, 0
    %p119 = por %p117, %p118
    %p120 = scmp.ne.s32.totalorder %s109, %s112
    %p121 = scmp.eq.s32.totalorder %s15, 1
    %p122 = por %p120, %p121
    %p123 = scmp.ne.s32.totalorder %s112, %s113
    %p124 = scmp.eq.s32.totalorder %s15, 0
    %p125 = por %p123, %p124
    %p126 = scmp.ne.s32.totalorder %s112, %s113
    %p127 = scmp.eq.s32.totalorder %s16, 1
    %p128 = por %p126, %p127
    %p130 = scmp.ne.s32.totalorder %s113, %s129
    %p131 = scmp.eq.s32.totalorder %s16, 0
    %p132 = por %p130, %p131
    %p133 = scmp.le.s32.totalorder 1, %s10
    %p134 = scmp.lt.s32.totalorder %s10, 3
    %p135 = pnand %p133, %p134
    %p136 = pneg %p135
    // Predicated region
    $region9: #{tpu_custom_call.1} parent=5 // pred_check
      _
    $region10: #{tpu_custom_call.1} parent=5 // pred_check_branch
      %138 = sbr.rel (%p135) target = $region12
    $region11: #{tpu_custom_call.1} parent=5 // pred_region
      %s139 = ssub.s32 %s10, 1
      // Predicated region
      $region13: #{tpu_custom_call.1} parent=11 // pred_check
        %p140 = pneg %p57
      $region14: #{tpu_custom_call.1} parent=11 // pred_check_branch
        %142 = sbr.rel (%p140) target = $region16
      $region15: #{tpu_custom_call.1} parent=11 // pred_region
        _
      $region16: #{tpu_custom_call.1} parent=11 // pred_fallthru
        _
      // Predicated region
      $region17: #{tpu_custom_call.1} parent=11 // pred_check
        %p143 = pneg %p78
      $region18: #{tpu_custom_call.1} parent=11 // pred_check_branch
        %145 = sbr.rel (%p143) target = $region20
      $region19: #{tpu_custom_call.1} parent=11 // pred_region
        _
      $region20: #{tpu_custom_call.1} parent=11 // pred_fallthru
        _
      // Predicated region
      $region21: #{tpu_custom_call.1} parent=11 // pred_check
        %p146 = pneg %p99
      $region22: #{tpu_custom_call.1} parent=11 // pred_check_branch
        %148 = sbr.rel (%p146) target = $region24
      $region23: #{tpu_custom_call.1} parent=11 // pred_region
        _
      $region24: #{tpu_custom_call.1} parent=11 // pred_fallthru
        _
    $region12: #{tpu_custom_call.1} parent=5 // pred_fallthru
      _
    %p149 = scmp.lt.s32.totalorder %s10, 2
    // Predicated region
    $region25: #{tpu_custom_call.1} parent=5 // pred_check
      %p150 = pneg %p149
    $region26: #{tpu_custom_call.1} parent=5 // pred_check_branch
      %152 = sbr.rel (%p150) target = $region28
    $region27: #{tpu_custom_call.1} parent=5 // pred_region
      // Predicated region
      $region29: #{tpu_custom_call.1} parent=27 // pred_check
        %p153 = pneg %p30
      $region30: #{tpu_custom_call.1} parent=27 // pred_check_branch
        %155 = sbr.rel (%p153) target = $region32
      $region31: #{tpu_custom_call.1} parent=27 // pred_region
        %p156 = scmp.lt.s32.totalorder %s10, 1
        %s157 = scalar_select %p156, %s10, 1
        %s158 = smul.addr %s157, 2
        %s159 = smul.addr %s158, 4
        %s160 = scalar_lea.vmem %s0, %s159
      $region32: #{tpu_custom_call.1} parent=27 // pred_fallthru
        _
    $region28: #{tpu_custom_call.1} parent=5 // pred_fallthru
      _
    %p161 = scmp.le.s32.totalorder 1, %s10
    %p162 = scmp.lt.s32.totalorder %s10, 3
    %p163 = pnand %p161, %p162
    %p164 = pneg %p163
    // Predicated region
    $region33: #{tpu_custom_call.1} parent=5 // pred_check
      _
    $region34: #{tpu_custom_call.1} parent=5 // pred_check_branch
      %166 = sbr.rel (%p163) target = $region36
    $region35: #{tpu_custom_call.1} parent=5 // pred_region
      %s167 = ssub.s32 %s10, 1
      %p168 = scmp.lt.s32.totalorder %s15, 1
      %s169 = scalar_select %p168, %s15, 1
      %s170 = smul.addr %s169, 2
      %s171 = smul.addr %s170, 4
      %s172 = scalar_lea.vmem %s0, %s171
      %p173 = pneg %p36
      %p174 = pneg %p33
      %p175 = pneg %p57
      %p176 = pneg %p54
      %p177 = pneg %p78
      %p178 = pneg %p75
      %p179 = pneg %p99
      %p180 = pneg %p96
      %p181 = pneg %p125
      %p182 = pneg %p122
      %p183 = scmp.lt.s32.totalorder %s15, 1
      %s184 = scalar_select %p183, %s15, 1
      %s185 = smul.addr %s184, 3
      %s186 = smul.addr %s185, 8
      %s187 = scalar_lea.vmem %s4, %s186
      %p188 = scmp.lt.s32.totalorder %s15, 1
      %s189 = scalar_select %p188, %s15, 1
      %s190 = smul.addr %s189, 2
      %s191 = smul.addr %s190, 4
      %s192 = scalar_lea.vmem %s0, %s191
      %p193 = scmp.lt.s32.totalorder %s15, 1
      %s194 = scalar_select %p193, %s15, 1
      %s195 = smul.addr %s194, 3
      %s196 = smul.addr %s195, 8
      %s197 = scalar_lea.vmem %s4, %s196
      %v199 = vld [vmem:[%s1] sm:$0xf]
      %v200 = vld [vmem:[%s1 + $0x4] sm:$0xf]
      %v201 = vld [vmem:[%s1 + $0x8] sm:$0xf]
      %v202 = vld [vmem:[%s1 + $0xc] sm:$0xf]
      %v203 = vld [vmem:[%s1 + $0x10] sm:$0xf]
      %v204 = vld [vmem:[%s1 + $0x14] sm:$0xf]
      %v205 = vld [vmem:[%s1 + $0x18] sm:$0xf]
      %v206 = vld [vmem:[%s1 + $0x1c] sm:$0xf]
      %v207 = vld [vmem:[%s192] sm:$0xf]
      %v208 = vld [vmem:[%s192 + $0x4] sm:$0xf]
      %v211 = vunpack.c.l.b16 %v207
      %v212 = vunpack.c.l.b16 %v208
      %v213 = vpack.c.b16 %v212, %v211
      %v222 = vunpack.c.l.b16 %v199
      %v223 = vunpack.c.l.b16 %v200
      %v224 = vunpack.c.l.b16 %v201
      %v225 = vunpack.c.l.b16 %v202
      %v226 = vunpack.c.l.b16 %v203
      %v227 = vunpack.c.l.b16 %v204
      %v228 = vunpack.c.l.b16 %v205
      %v229 = vunpack.c.l.b16 %v206
      %v230 = vpack.c.b16 %v223, %v222
      %v231 = vpack.c.b16 %v225, %v224
      %v232 = vpack.c.b16 %v227, %v226
      %v233 = vpack.c.b16 %v229, %v228
      %vm238 = vcmask 523264
      %v240 = vsel %vm238, %v213, 0
      %242 = vmatpush.bf16.msra.mxu0 0
      %243 = vmatpush.bf16.msra.mxu0 0
      %244 = vmatpush.bf16.msra.mxu0 0
      %245 = vmatpush.bf16.msra.mxu0 0
      %246 = vmatpush.bf16.msra.mxu0 %v233
      %247 = vmatpush.bf16.msra.mxu0 %v232
      %248 = vmatpush.bf16.msra.mxu0 %v231
      %249 = vmatpush.bf16.msra.mxu0 %v230
      %250 = vmatmul.bf16.gmra.mxu0 %v240
      %v251 = vpop.f32.mrf.mxu0
      %v252 = vadd.f32 0.0, %v251
      %v253 = vpop.f32.mrf.mxu0
      %v254 = vadd.f32 0.0, %v253
      %255 = vdwg.mxu0
      %v256 = vld [vmem:[%s2] sm:$0xff]
      %v257 = vld [vmem:[%s2 + $0x8] sm:$0xff]
      %v258 = vadd.f32 %v252, %v256
      %v259 = vadd.f32 %v254, %v257
      %vm260 = vcmask 261120
      %261 = vst.msk [vmem:[%s197 + $0x1] sm:$0xff] %vm260, %v258
      %262 = vst.msk [vmem:[%s197 + $0x9] sm:$0xff] %vm260, %v259
      %v263 = vld [vmem:[%s3] sm:$0x1]
      %vm264 = vcmask 253952
      %265 = vst.msk [vmem:[%s197] sm:$0x1] %vm264, %v263
      %p266 = scmp.lt.s32.totalorder %s15, 1
      %s267 = scalar_select %p266, %s15, 1
      %s268 = smul.addr %s267, 3
      %s269 = smul.addr %s268, 8
      %s270 = scalar_lea.vmem %s4, %s269
      // Predicated region
      $region37: #{tpu_custom_call.1} parent=35 // pred_check
        %p271 = pneg %p122
      $region38: #{tpu_custom_call.1} parent=35 // pred_check_branch
        %273 = sbr.rel (%p271) target = $region40
      $region39: #{tpu_custom_call.1} parent=35 // pred_region
        _
      $region40: #{tpu_custom_call.1} parent=35 // pred_fallthru
        _
    $region36: #{tpu_custom_call.1} parent=5 // pred_fallthru
      _
    %p274 = scmp.le.s32.totalorder 2, %s10
    // Predicated region
    $region41: #{tpu_custom_call.1} parent=5 // pred_check
      %p275 = pneg %p274
    $region42: #{tpu_custom_call.1} parent=5 // pred_check_branch
      %277 = sbr.rel (%p275) target = $region44
    $region43: #{tpu_custom_call.1} parent=5 // pred_region
      %s278 = ssub.s32 %s10, 2
      // Predicated region
      $region45: #{tpu_custom_call.1} parent=43 // pred_check
        %p279 = pneg %p128
      $region46: #{tpu_custom_call.1} parent=43 // pred_check_branch
        %281 = sbr.rel (%p279) target = $region48
      $region47: #{tpu_custom_call.1} parent=43 // pred_region
        %p282 = scmp.lt.s32.totalorder %s16, 1
        %s283 = scalar_select %p282, %s16, 1
        %s284 = smul.addr %s283, 3
        %s285 = smul.addr %s284, 8
        %s286 = scalar_lea.vmem %s4, %s285
      $region48: #{tpu_custom_call.1} parent=43 // pred_fallthru
        _
    $region44: #{tpu_custom_call.1} parent=5 // pred_fallthru
      _
  $region6: #{tpu_custom_call.1} parent=0 // loop_footer
    %s14 = sadd.s32 1, %s10
  $region7: #{tpu_custom_call.1} parent=0 // loop_footer_branch
    %9 = sbr.rel target = $region3
  $region8: #{tpu_custom_call.1} parent=0 // loop_exit
    _

</llo_original>
